<compile_context>
chip_gen: v7x
topology: tpu7x:2x2x1
jax: 0.10.0
libtpu: 0.0.40
codegen_flags: <defaults>
</compile_context>

<pallas_src>
import functools

import jax
import jax.numpy as jnp
from jax.experimental import pallas as pl
from jax.experimental.pallas import tpu as pltpu


def _round_up(a: int, b: int) -> int:
    return (a + b - 1) // b * b


# ---------------------------------------------------------------------------
# Conv2d(k=3, s=2, p=1): wrapper-side im2col + tiled MXU matmul kernel.
# ---------------------------------------------------------------------------
def _matmul_bias_kernel(a_ref, b_ref, bias_ref, o_ref, acc_ref):
    # a_ref: (tm, tk), b_ref: (tk, tn), bias_ref: (1, tn), o_ref: (tm, tn)
    # acc_ref: VMEM f32 scratch (tm, tn), persistent across the K grid axis.
    k = pl.program_id(2)

    @pl.when(k == 0)
    def _():
        acc_ref[...] = jnp.zeros_like(acc_ref)

    acc_ref[...] += jnp.dot(a_ref[...], b_ref[...],
                            preferred_element_type=jnp.float32)

    @pl.when(k == pl.num_programs(2) - 1)
    def _():
        o_ref[...] = (acc_ref[...] +
                      bias_ref[...].astype(jnp.float32)).astype(o_ref.dtype)


def conv3x3_stride2_pad1_nhwc(x_nhwc, w_hwio, b):
    """x_nhwc: (N, H, W, Cin); w_hwio: (3, 3, Cin, Cout); b: (Cout,)."""
    n, h, w, cin = x_nhwc.shape
    cout = w_hwio.shape[-1]
    oh = (h + 2 - 3) // 2 + 1
    ow = (w + 2 - 3) // 2 + 1
    dt = x_nhwc.dtype

    # ---- wrapper glue: pad + im2col (strided slicing happens in XLA, not in
    #      the kernel; every kernel load is a dense tile). -------------------
    x_pad = jnp.pad(x_nhwc, ((0, 0), (1, 1), (1, 1), (0, 0)))
    taps = [x_pad[:, kh:kh + 2 * oh:2, kw:kw + 2 * ow:2, :]
            for kh in range(3) for kw in range(3)]
    patches = jnp.concatenate(taps, axis=-1)              # (N, OH, OW, 9*Cin)

    m = n * oh * ow
    kdim = 9 * cin

    # ---- tiling: lane-dense, 8/128 aligned, sized well under VMEM budgets ---
    kp = _round_up(kdim, 128)                  # K padded -> aligned vld / MXU
    coutp = _round_up(cout, 128)               # lane-dense output stores

    # M tile: biggest that fits with bounded padding waste (per-step overhead
    # on TPU is ~0.35us, so fewer/bigger grid steps win when M is large).
    if m % 512 == 0 or m >= 2048:
        tm = 512
    elif m >= 256:
        tm = 256
    else:
        tm = _round_up(m, 8)
    mp = _round_up(m, tm)

    tn = 256 if coutp % 256 == 0 else 128
    if kp <= 1024:
        tk = kp
    elif kp % 512 == 0:
        tk = 512
    elif kp % 256 == 0:
        tk = 256
    else:
        tk = 128

    a = jnp.pad(patches.reshape(m, kdim), ((0, mp - m), (0, kp - kdim)))
    bmat = jnp.pad(w_hwio.astype(dt).reshape(kdim, cout),
                   ((0, kp - kdim), (0, coutp - cout)))
    bias2 = jnp.pad(b, (0, coutp - cout)).reshape(1, coutp)

    grid = (mp // tm, coutp // tn, kp // tk)
    itemsize = jnp.dtype(dt).itemsize
    cost = pl.CostEstimate(
        flops=2 * m * kdim * cout,
        transcendentals=0,
        bytes_accessed=(a.size + bmat.size + mp * coutp) * itemsize)

    out2d = pl.pallas_call(
        _matmul_bias_kernel,
        out_shape=jax.ShapeDtypeStruct((mp, coutp), dt),
        grid=grid,
        in_specs=[
            pl.BlockSpec((tm, tk), lambda i, j, k: (i, k)),
            pl.BlockSpec((tk, tn), lambda i, j, k: (k, j)),
            pl.BlockSpec((1, tn), lambda i, j, k: (0, j)),
        ],
        out_specs=pl.BlockSpec((tm, tn), lambda i, j, k: (i, j)),
        scratch_shapes=[pltpu.VMEM((tm, tn), jnp.float32)],
        compiler_params=pltpu.CompilerParams(
            dimension_semantics=("parallel", "parallel", "arbitrary"),
            vmem_limit_bytes=32 * 1024 * 1024),
        cost_estimate=cost,
    )(a, bmat, bias2)

    # un-pad + reshape in the wrapper (metadata only, no in-kernel reshape).
    return out2d[:m, :cout].reshape(n, oh, ow, cout)


# ---------------------------------------------------------------------------
# AvgPool2d(kernel_size=2, stride=2): HBM-bound, large lane-dense row blocks.
# ---------------------------------------------------------------------------
def _avgpool2x2_kernel(x_ref, o_ref, *, c):
    # x_ref: (tb, 2, OW, 2*C)  ->  o_ref: (tb, OW, C)
    x = x_ref[...].astype(jnp.float32)
    rs = x[:, 0] + x[:, 1]                     # H-phase sum (major-dim slice)
    # W-phase sum: even cols live in lanes [0:C), odd cols in lanes [C:2C).
    o_ref[...] = ((rs[:, :, :c] + rs[:, :, c:]) * 0.25).astype(o_ref.dtype)


def avgpool2x2_nhwc(x_nhwc):
    n, h, w, c = x_nhwc.shape
    oh, ow = h // 2, w // 2
    # PyTorch AvgPool2d floors: drop a trailing odd row/col (no-op when even).
    x_c = x_nhwc[:, :2 * oh, :2 * ow, :]
    # Pure-metadata view: (N*OH, 2, OW, 2*C).
    xv = x_c.reshape(n * oh, 2, ow, 2 * c)

    rows = n * oh
    itemsize = jnp.dtype(x_nhwc.dtype).itemsize
    row_bytes = 2 * 2 * ow * c * itemsize
    # ~3 MiB input block (double buffered) keeps us inside every chip's
    # scoped VMEM default while still amortizing per-step overhead.
    tb = max(1, min(rows, (3 * 1024 * 1024) // max(1, row_bytes)))
    while rows % tb:                           # tb must divide the row count
        tb -= 1

    out = pl.pallas_call(
        functools.partial(_avgpool2x2_kernel, c=c),
        out_shape=jax.ShapeDtypeStruct((rows, ow, c), x_nhwc.dtype),
        grid=(rows // tb,),
        in_specs=[pl.BlockSpec((tb, 2, ow, 2 * c), lambda r: (r, 0, 0, 0))],
        out_specs=pl.BlockSpec((tb, ow, c), lambda r: (r, 0, 0)),
        compiler_params=pltpu.CompilerParams(
            dimension_semantics=("parallel",),
            vmem_limit_bytes=32 * 1024 * 1024),
    )(xv)
    return out.reshape(n, oh, ow, c)


# ---------------------------------------------------------------------------
# Module-equivalent wrappers
# ---------------------------------------------------------------------------
def downsample_nhwc(x_nhwc, params, use_conv: bool):
    """NHWC-native entry point (no layout round trips)."""
    if use_conv:
        w_hwio = jnp.transpose(params["weight"], (2, 3, 1, 0))
        return conv3x3_stride2_pad1_nhwc(x_nhwc, w_hwio, params["bias"])
    return avgpool2x2_nhwc(x_nhwc)


def downsample(x_nchw, params, use_conv: bool):
    """PyTorch-facing NCHW adapter (transposes are interface glue only; keep
    the surrounding model NHWC and call downsample_nhwc to avoid them)."""
    x_nhwc = jnp.transpose(x_nchw, (0, 2, 3, 1))
    y = downsample_nhwc(x_nhwc, params, use_conv)
    return jnp.transpose(y, (0, 3, 1, 2))


if __name__ == "__main__":
    key = jax.random.PRNGKey(0)
    k_x, k_w, k_b = jax.random.split(key, 3)

    N, Cin, H, W = 2, 4, 16, 16
    Cout = 8

    x = jax.random.normal(k_x, (N, Cin, H, W), dtype=jnp.float32)
    # deterministic "PyTorch-like" init: uniform(-b, b), b = 1/sqrt(fan_in*k*k)
    fan_in = Cin * 3 * 3
    bound = 1.0 / jnp.sqrt(jnp.float32(fan_in))
    weight = jax.random.uniform(k_w, (Cout, Cin, 3, 3), jnp.float32, -bound, bound)
    bias = jax.random.uniform(k_b, (Cout,), jnp.float32, -bound, bound)
    params = {"weight": weight, "bias": bias}

    # --- use_conv=True path ---
    y_conv = jax.block_until_ready(downsample(x, params, use_conv=True))
    assert y_conv.shape == (N, Cout, H // 2, W // 2)
    y_ref = jax.lax.conv_general_dilated(
        x, weight, window_strides=(2, 2), padding=((1, 1), (1, 1)),
        dimension_numbers=("NCHW", "OIHW", "NCHW")) + bias[None, :, None, None]
    assert jnp.allclose(y_conv, y_ref, atol=1e-4, rtol=1e-4), \
        float(jnp.max(jnp.abs(y_conv - y_ref)))

    # --- use_conv=False path ---
    y_pool = jax.block_until_ready(downsample(x, params, use_conv=False))
    assert y_pool.shape == (N, Cin, H // 2, W // 2)
    x_nhwc = jnp.transpose(x, (0, 2, 3, 1))
    pool_ref = x_nhwc.reshape(N, H // 2, 2, W // 2, 2, Cin).mean(axis=(2, 4))
    assert jnp.allclose(y_pool, jnp.transpose(pool_ref, (0, 3, 1, 2)),
                        atol=1e-5, rtol=1e-5)

    print("KERNEL_OK")
</pallas_src>

<mosaic_0001>
module attributes {stable_mosaic.version = 11 : i64} {
  func.func @_matmul_bias_kernel(%arg0: i32, %arg1: i32, %arg2: i32, %arg3: memref<128x128xf32, #tpu.memory_space<vmem>>, %arg4: memref<128x128xf32, #tpu.memory_space<vmem>>, %arg5: memref<1x128xf32, #tpu.memory_space<vmem>>, %arg6: memref<128x128xf32, #tpu.memory_space<vmem>>, %arg7: memref<128x128xf32, #tpu.memory_space<vmem>>) attributes {dimension_semantics = [#tpu.dimension_semantics<parallel>, #tpu.dimension_semantics<parallel>, #tpu.dimension_semantics<arbitrary>], iteration_bounds = array<i64: 1, 1, 1>, scalar_prefetch = 0 : i64, scratch_operands = 1 : i64, tpu.core_type = #tpu.core_type<tc>, window_params = [{transform_indices = @transform_0, window_bounds = array<i64: 128, 128>}, {transform_indices = @transform_1, window_bounds = array<i64: 128, 128>}, {transform_indices = @transform_2, window_bounds = array<i64: 1, 128>}, {transform_indices = @transform_3, window_bounds = array<i64: 128, 128>}]} {
    %c0_i32 = arith.constant 0 : i32
    %0 = arith.cmpi eq, %arg2, %c0_i32 : i32
    %1 = arith.extui %0 : i1 to i32
    %c0_i32_0 = arith.constant 0 : i32
    %2 = arith.cmpi ne, %1, %c0_i32_0 : i32
    scf.if %2 {
      %cst_10 = arith.constant 0.000000e+00 : f32
      %12 = vector.broadcast %cst_10 : f32 to vector<128x128xf32>
      %c0_11 = arith.constant 0 : index
      %c0_12 = arith.constant 0 : index
      %13 = vector.load %arg7[%c0_11, %c0_12] : memref<128x128xf32, #tpu.memory_space<vmem>>, vector<128x128xf32>
      tpu.vector_store %arg7[%c0_11, %c0_12], %12 {strides = array<i32>} : memref<128x128xf32, #tpu.memory_space<vmem>>, vector<128x128xf32>,
    } else {
    }
    %c0 = arith.constant 0 : index
    %c0_1 = arith.constant 0 : index
    %3 = vector.load %arg7[%c0, %c0_1] : memref<128x128xf32, #tpu.memory_space<vmem>>, vector<128x128xf32>
    %c0_2 = arith.constant 0 : index
    %c0_3 = arith.constant 0 : index
    %4 = vector.load %arg3[%c0_2, %c0_3] : memref<128x128xf32, #tpu.memory_space<vmem>>, vector<128x128xf32>
    %c0_4 = arith.constant 0 : index
    %c0_5 = arith.constant 0 : index
    %5 = vector.load %arg4[%c0_4, %c0_5] : memref<128x128xf32, #tpu.memory_space<vmem>>, vector<128x128xf32>
    %cst = arith.constant dense<0.000000e+00> : vector<128x128xf32>
    %6 = tpu.matmul %4, %5, %cst {dimension_numbers = #tpu.dot_dimension_numbers<[1], [0], [0], [1], [0, 0, 1, 1], [], []>} : vector<128x128xf32>, vector<128x128xf32>, vector<128x128xf32> -> vector<128x128xf32>
    %7 = arith.addf %3, %6 : vector<128x128xf32>
    %c0_6 = arith.constant 0 : index
    %c0_7 = arith.constant 0 : index
    %8 = vector.load %arg7[%c0_6, %c0_7] : memref<128x128xf32, #tpu.memory_space<vmem>>, vector<128x128xf32>
    tpu.vector_store %arg7[%c0_6, %c0_7], %7 {strides = array<i32>} : memref<128x128xf32, #tpu.memory_space<vmem>>, vector<128x128xf32>,
    %c0_i32_8 = arith.constant 0 : i32
    %9 = arith.cmpi eq, %arg2, %c0_i32_8 : i32
    %10 = arith.extui %9 : i1 to i32
    %c0_i32_9 = arith.constant 0 : i32
    %11 = arith.cmpi ne, %10, %c0_i32_9 : i32
    scf.if %11 {
      %c0_10 = arith.constant 0 : index
      %c0_11 = arith.constant 0 : index
      %12 = vector.load %arg7[%c0_10, %c0_11] : memref<128x128xf32, #tpu.memory_space<vmem>>, vector<128x128xf32>
      %c0_12 = arith.constant 0 : index
      %c0_13 = arith.constant 0 : index
      %13 = vector.load %arg5[%c0_12, %c0_13] : memref<1x128xf32, #tpu.memory_space<vmem>>, vector<1x128xf32>
      %14 = vector.broadcast %13 : vector<1x128xf32> to vector<128x128xf32>
      %15 = arith.addf %12, %14 : vector<128x128xf32>
      %c0_14 = arith.constant 0 : index
      %c0_15 = arith.constant 0 : index
      %16 = vector.load %arg6[%c0_14, %c0_15] : memref<128x128xf32, #tpu.memory_space<vmem>>, vector<128x128xf32>
      tpu.vector_store %arg6[%c0_14, %c0_15], %15 {strides = array<i32>} : memref<128x128xf32, #tpu.memory_space<vmem>>, vector<128x128xf32>,
    } else {
    }
    return
  }
  func.func @transform_0(%arg0: i32, %arg1: i32, %arg2: i32) -> (i32, i32) {
    %c0_i32 = arith.constant 0 : i32
    return %arg0, %arg2 : i32, i32
  }
  func.func @transform_1(%arg0: i32, %arg1: i32, %arg2: i32) -> (i32, i32) {
    %c0_i32 = arith.constant 0 : i32
    return %arg2, %arg1 : i32, i32
  }
  func.func @transform_2(%arg0: i32, %arg1: i32, %arg2: i32) -> (i32, i32) {
    %c0_i32 = arith.constant 0 : i32
    %c0_i32_0 = arith.constant 0 : i32
    return %c0_i32, %arg1 : i32, i32
  }
  func.func @transform_3(%arg0: i32, %arg1: i32, %arg2: i32) -> (i32, i32) {
    %c0_i32 = arith.constant 0 : i32
    return %arg0, %arg1 : i32, i32
  }
}

</mosaic_0001>

<llo_original>
// kernel: tpu_custom_call.1
$region0: #{tpu_custom_call.1}
  #allocation0 [shape = 'u32[]', space=smem, size = 0x4, offset = 0x4, fixed_abs, tag = 'smem constant byte address 0x4 - core index']
  #allocation1 [shape = 'u32[144,128]{1,0:T(1,128)}', space=vmem, size = 0x12000, scoped, tag = 'internal scratch']
  #allocation2 [shape = 'f32[128,128]{1,0:T(8,128)}', space=vmem, size = 0x10000, scoped, tag = 'scratch operand']
  %s0 = inlined_call_operand.hbm [shape: f32[128,128], index: 0, kind: input, shape index: {}]
  %s1 = inlined_call_operand.hbm [shape: f32[128,128], index: 1, kind: input, shape index: {}]
  %s2 = inlined_call_operand.vmem [shape: f32[1,128], index: 2, kind: input, shape index: {}]
  %s3 = inlined_call_operand.hbm [shape: f32[128,128], index: 3, kind: output, shape index: {}]
  %s4 = sld [smem:[#allocation0]]
  $region38: #{tpu_custom_call.1} parent=0
    _
  %s6 = ssub.s32 1, %s4
  %s7 = scalar_select 0, %s6, %s4
  $region1: #{tpu_custom_call.1} parent=0
    #allocation3 [shape = 'u8[65536]{0}', space=vmem, size = 0x10000, scoped, tag = 'input window, operand 0, single buffered']
    #allocation4 [shape = 's32[1]{0}', space=sflag, size = 0x4, scoped, tag = 'scoped memory for tpu_custom_call.1']
    #allocation5 [shape = 's32[1]{0}', space=sflag, size = 0x4, scoped, tag = 'scoped memory for tpu_custom_call.1']
    #allocation6 [shape = 'u8[65536]{0}', space=vmem, size = 0x10000, scoped, tag = 'input window, operand 1, single buffered']
    #allocation7 [shape = 's32[1]{0}', space=sflag, size = 0x4, scoped, tag = 'scoped memory for tpu_custom_call.1']
    #allocation8 [shape = 'u8[65536]{0}', space=vmem, size = 0x10000, scoped, tag = 'output window, operand 0, single buffered']
    %8 = vsyncpa [#allocation4], 0
    %9 = vsyncpa [#allocation7], 0
    %10 = vsyncpa [#allocation5], 0
    // Predicated region
    $region2: #{tpu_custom_call.1} parent=1 // pred_check
      _
    $region3: #{tpu_custom_call.1} parent=1 // pred_check_branch
      %12 = sbr.rel (0) target = $region5
    $region4: #{tpu_custom_call.1} parent=1 // pred_region
      %s14 = ssub.s32 2048, 2048
      %15 = vsyncadd [#allocation4], %s14
      %s16 = sshll.u32 [#allocation3], 4
      %s17 = int_to_ptr.vmem [resolvable:$true] %s16
      %22 = dma.hbm_to_vmem [thread:$0]  %s0, 2048, %s17, [#allocation4], 128, 128, 8
    $region5: #{tpu_custom_call.1} parent=1 // pred_fallthru
      _
    // Predicated region
    $region6: #{tpu_custom_call.1} parent=1 // pred_check
      _
    $region7: #{tpu_custom_call.1} parent=1 // pred_check_branch
      %24 = sbr.rel (0) target = $region9
    $region8: #{tpu_custom_call.1} parent=1 // pred_region
      %s26 = ssub.s32 2048, 2048
      %27 = vsyncadd [#allocation7], %s26
      %s28 = sshll.u32 [#allocation6], 4
      %s29 = int_to_ptr.vmem [resolvable:$true] %s28
      %34 = dma.hbm_to_vmem [thread:$0]  %s1, 2048, %s29, [#allocation7], 128, 128, 8
    $region9: #{tpu_custom_call.1} parent=1 // pred_fallthru
      _
    // Predicated region
    $region10: #{tpu_custom_call.1} parent=1 // pred_check
      _
    $region11: #{tpu_custom_call.1} parent=1 // pred_check_branch
      %36 = sbr.rel (0) target = $region13
    $region12: #{tpu_custom_call.1} parent=1 // pred_region
      _
    $region13: #{tpu_custom_call.1} parent=1 // pred_fallthru
      _
    // Predicated region
    $region14: #{tpu_custom_call.1} parent=1 // pred_check
      _
    $region15: #{tpu_custom_call.1} parent=1 // pred_check_branch
      %38 = sbr.rel (0) target = $region17
    $region16: #{tpu_custom_call.1} parent=1 // pred_region
      %39 = dma.done [#allocation4], 2048
    $region17: #{tpu_custom_call.1} parent=1 // pred_fallthru
      _
    // Predicated region
    $region18: #{tpu_custom_call.1} parent=1 // pred_check
      _
    $region19: #{tpu_custom_call.1} parent=1 // pred_check_branch
      %41 = sbr.rel (0) target = $region21
    $region20: #{tpu_custom_call.1} parent=1 // pred_region
      %42 = dma.done [#allocation7], 2048
    $region21: #{tpu_custom_call.1} parent=1 // pred_fallthru
      _
    %p43 = scmp.eq.s32.totalorder 0, 0
    // Predicated region
    $region22: #{tpu_custom_call.1} parent=1 // pred_check
      %p44 = pneg %p43
    $region23: #{tpu_custom_call.1} parent=1 // pred_check_branch
      %46 = sbr.rel (%p44) target = $region25
    $region24: #{tpu_custom_call.1} parent=1 // pred_region
      %47 = vst [vmem:[#allocation2] sm:$0xff] 0.0
      %48 = vst [vmem:[#allocation2 + $0x8] sm:$0xff] 0.0
      %49 = vst [vmem:[#allocation2 + $0x10] sm:$0xff] 0.0
      %50 = vst [vmem:[#allocation2 + $0x18] sm:$0xff] 0.0
      %51 = vst [vmem:[#allocation2 + $0x20] sm:$0xff] 0.0
      %52 = vst [vmem:[#allocation2 + $0x28] sm:$0xff] 0.0
      %53 = vst [vmem:[#allocation2 + $0x30] sm:$0xff] 0.0
      %54 = vst [vmem:[#allocation2 + $0x38] sm:$0xff] 0.0
      %55 = vst [vmem:[#allocation2 + $0x40] sm:$0xff] 0.0
      %56 = vst [vmem:[#allocation2 + $0x48] sm:$0xff] 0.0
      %57 = vst [vmem:[#allocation2 + $0x50] sm:$0xff] 0.0
      %58 = vst [vmem:[#allocation2 + $0x58] sm:$0xff] 0.0
      %59 = vst [vmem:[#allocation2 + $0x60] sm:$0xff] 0.0
      %60 = vst [vmem:[#allocation2 + $0x68] sm:$0xff] 0.0
      %61 = vst [vmem:[#allocation2 + $0x70] sm:$0xff] 0.0
      %62 = vst [vmem:[#allocation2 + $0x78] sm:$0xff] 0.0
    $region25: #{tpu_custom_call.1} parent=1 // pred_fallthru
      _
    %v63 = vld [vmem:[#allocation2] sm:$0xff]
    %v64 = vld [vmem:[#allocation2 + $0x8] sm:$0xff]
    %v65 = vld [vmem:[#allocation2 + $0x10] sm:$0xff]
    %v66 = vld [vmem:[#allocation2 + $0x18] sm:$0xff]
    %v67 = vld [vmem:[#allocation2 + $0x20] sm:$0xff]
    %v68 = vld [vmem:[#allocation2 + $0x28] sm:$0xff]
    %v69 = vld [vmem:[#allocation2 + $0x30] sm:$0xff]
    %v70 = vld [vmem:[#allocation2 + $0x38] sm:$0xff]
    %v71 = vld [vmem:[#allocation2 + $0x40] sm:$0xff]
    %v72 = vld [vmem:[#allocation2 + $0x48] sm:$0xff]
    %v73 = vld [vmem:[#allocation2 + $0x50] sm:$0xff]
    %v74 = vld [vmem:[#allocation2 + $0x58] sm:$0xff]
    %v75 = vld [vmem:[#allocation2 + $0x60] sm:$0xff]
    %v76 = vld [vmem:[#allocation2 + $0x68] sm:$0xff]
    %v77 = vld [vmem:[#allocation2 + $0x70] sm:$0xff]
    %v78 = vld [vmem:[#allocation2 + $0x78] sm:$0xff]
    %v79 = vld [vmem:[#allocation3] sm:$0xff]
    %v80 = vld [vmem:[#allocation3 + $0x8] sm:$0xff]
    %v81 = vld [vmem:[#allocation3 + $0x10] sm:$0xff]
    %v82 = vld [vmem:[#allocation3 + $0x18] sm:$0xff]
    %v83 = vld [vmem:[#allocation3 + $0x20] sm:$0xff]
    %v84 = vld [vmem:[#allocation3 + $0x28] sm:$0xff]
    %v85 = vld [vmem:[#allocation3 + $0x30] sm:$0xff]
    %v86 = vld [vmem:[#allocation3 + $0x38] sm:$0xff]
    %v87 = vld [vmem:[#allocation3 + $0x40] sm:$0xff]
    %v88 = vld [vmem:[#allocation3 + $0x48] sm:$0xff]
    %v89 = vld [vmem:[#allocation3 + $0x50] sm:$0xff]
    %v90 = vld [vmem:[#allocation3 + $0x58] sm:$0xff]
    %v91 = vld [vmem:[#allocation3 + $0x60] sm:$0xff]
    %v92 = vld [vmem:[#allocation3 + $0x68] sm:$0xff]
    %v93 = vld [vmem:[#allocation3 + $0x70] sm:$0xff]
    %v94 = vld [vmem:[#allocation3 + $0x78] sm:$0xff]
    %v95 = vld [vmem:[#allocation6] sm:$0xff]
    %v96 = vld [vmem:[#allocation6 + $0x8] sm:$0xff]
    %v97 = vld [vmem:[#allocation6 + $0x10] sm:$0xff]
    %v98 = vld [vmem:[#allocation6 + $0x18] sm:$0xff]
    %v99 = vld [vmem:[#allocation6 + $0x20] sm:$0xff]
    %v100 = vld [vmem:[#allocation6 + $0x28] sm:$0xff]
    %v101 = vld [vmem:[#allocation6 + $0x30] sm:$0xff]
    %v102 = vld [vmem:[#allocation6 + $0x38] sm:$0xff]
    %v103 = vld [vmem:[#allocation6 + $0x40] sm:$0xff]
    %v104 = vld [vmem:[#allocation6 + $0x48] sm:$0xff]
    %v105 = vld [vmem:[#allocation6 + $0x50] sm:$0xff]
    %v106 = vld [vmem:[#allocation6 + $0x58] sm:$0xff]
    %v107 = vld [vmem:[#allocation6 + $0x60] sm:$0xff]
    %v108 = vld [vmem:[#allocation6 + $0x68] sm:$0xff]
    %v109 = vld [vmem:[#allocation6 + $0x70] sm:$0xff]
    %v110 = vld [vmem:[#allocation6 + $0x78] sm:$0xff]
    %111 = vmatprep.subr.mxu0 0.0
    %112 = vmatpush1.msra.mxu0 %v95
    %113 = vmatprep.subr.mxu0 0.0
    %114 = vmatpush1.msra.mxu0 %v96
    %115 = vmatprep.subr.mxu0 0.0
    %116 = vmatpush1.msra.mxu0 %v97
    %117 = vmatprep.subr.mxu0 0.0
    %118 = vmatpush1.msra.mxu0 %v98
    %119 = vmatprep.subr.mxu0 0.0
    %120 = vmatpush1.msra.mxu0 %v99
    %121 = vmatprep.subr.mxu0 0.0
    %122 = vmatpush1.msra.mxu0 %v100
    %123 = vmatprep.subr.mxu0 0.0
    %124 = vmatpush1.msra.mxu0 %v101
    %125 = vmatprep.subr.mxu0 0.0
    %126 = vmatpush1.msra.mxu0 %v102
    %127 = vmatprep.subr.mxu0 0.0
    %128 = vmatpush1.msra.mxu0 %v103
    %129 = vmatprep.subr.mxu0 0.0
    %130 = vmatpush1.msra.mxu0 %v104
    %131 = vmatprep.subr.mxu0 0.0
    %132 = vmatpush1.msra.mxu0 %v105
    %133 = vmatprep.subr.mxu0 0.0
    %134 = vmatpush1.msra.mxu0 %v106
    %135 = vmatprep.subr.mxu0 0.0
    %136 = vmatpush1.msra.mxu0 %v107
    %137 = vmatprep.subr.mxu0 0.0
    %138 = vmatpush1.msra.mxu0 %v108
    %139 = vmatprep.subr.mxu0 0.0
    %140 = vmatpush1.msra.mxu0 %v109
    %141 = vmatprep.subr.mxu0 0.0
    %142 = vmatpush1.msra.mxu0 %v110
    %143 = vmatprep.subr.mxu0 0.0
    %144 = vmatpush1.msra.mxu0 0.0
    %145 = vmatprep.subr.mxu0 0.0
    %146 = vmatpush1.msra.mxu0 0.0
    %147 = vmatprep.subr.mxu0 0.0
    %148 = vmatpush1.msra.mxu0 0.0
    %149 = vmatprep.subr.mxu0 0.0
    %150 = vmatpush1.msra.mxu0 0.0
    %151 = vmatprep.subr.mxu0 0.0
    %152 = vmatpush1.msra.mxu0 0.0
    %153 = vmatprep.subr.mxu0 0.0
    %154 = vmatpush1.msra.mxu0 0.0
    %155 = vmatprep.subr.mxu0 0.0
    %156 = vmatpush1.msra.mxu0 0.0
    %157 = vmatprep.subr.mxu0 0.0
    %158 = vmatpush1.msra.mxu0 0.0
    %159 = vmatprep.subr.mxu0 0.0
    %160 = vmatpush1.msra.mxu0 0.0
    %161 = vmatprep.subr.mxu0 0.0
    %162 = vmatpush1.msra.mxu0 0.0
    %163 = vmatprep.subr.mxu0 0.0
    %164 = vmatpush1.msra.mxu0 0.0
    %165 = vmatprep.subr.mxu0 0.0
    %166 = vmatpush1.msra.mxu0 0.0
    %167 = vmatprep.subr.mxu0 0.0
    %168 = vmatpush1.msra.mxu0 0.0
    %169 = vmatprep.subr.mxu0 0.0
    %170 = vmatpush1.msra.mxu0 0.0
    %171 = vmatprep.subr.mxu0 0.0
    %172 = vmatpush1.msra.mxu0 0.0
    %173 = vmatprep.subr.mxu0 0.0
    %174 = vmatpush1.msra.mxu0 0.0
    %175 = vmatprep.mubr.f32.mxu0 0.0
    %176 = vmatmul.mubr.f32.gmra.mrb[0].mxu0 %v79
    %v177 = vpop.f32.mrb[0].mxu0
    %v178 = vadd.f32 0.0, %v177
    %v179 = vpop.f32.mrb[0].mxu0
    %180 = vmatprep.mubr.f32.mxu0 0.0
    %181 = vmatmul.mubr.f32.gmra.mrb[0].mxu0 %v80
    %v182 = vpop.f32.mrb[0].mxu0
    %v183 = vadd.f32 0.0, %v182
    %v184 = vpop.f32.mrb[0].mxu0
    %185 = vmatprep.mubr.f32.mxu0 0.0
    %186 = vmatmul.mubr.f32.gmra.mrb[0].mxu0 %v81
    %v187 = vpop.f32.mrb[0].mxu0
    %v188 = vadd.f32 0.0, %v187
    %v189 = vpop.f32.mrb[0].mxu0
    %190 = vmatprep.mubr.f32.mxu0 0.0
    %191 = vmatmul.mubr.f32.gmra.mrb[0].mxu0 %v82
    %v192 = vpop.f32.mrb[0].mxu0
    %v193 = vadd.f32 0.0, %v192
    %v194 = vpop.f32.mrb[0].mxu0
    %195 = vmatprep.mubr.f32.mxu0 0.0
    %196 = vmatmul.mubr.f32.gmra.mrb[0].mxu0 %v83
    %v197 = vpop.f32.mrb[0].mxu0
    %v198 = vadd.f32 0.0, %v197
    %v199 = vpop.f32.mrb[0].mxu0
    %200 = vmatprep.mubr.f32.mxu0 0.0
    %201 = vmatmul.mubr.f32.gmra.mrb[0].mxu0 %v84
    %v202 = vpop.f32.mrb[0].mxu0
    %v203 = vadd.f32 0.0, %v202
    %v204 = vpop.f32.mrb[0].mxu0
    %205 = vmatprep.mubr.f32.mxu0 0.0
    %206 = vmatmul.mubr.f32.gmra.mrb[0].mxu0 %v85
    %v207 = vpop.f32.mrb[0].mxu0
    %v208 = vadd.f32 0.0, %v207
    %v209 = vpop.f32.mrb[0].mxu0
    %210 = vmatprep.mubr.f32.mxu0 0.0
    %211 = vmatmul.mubr.f32.gmra.mrb[0].mxu0 %v86
    %v212 = vpop.f32.mrb[0].mxu0
    %v213 = vadd.f32 0.0, %v212
    %v214 = vpop.f32.mrb[0].mxu0
    %215 = vmatprep.mubr.f32.mxu0 0.0
    %216 = vmatmul.mubr.f32.gmra.mrb[0].mxu0 %v87
    %v217 = vpop.f32.mrb[0].mxu0
    %v218 = vadd.f32 0.0, %v217
    %v219 = vpop.f32.mrb[0].mxu0
    %220 = vmatprep.mubr.f32.mxu0 0.0
    %221 = vmatmul.mubr.f32.gmra.mrb[0].mxu0 %v88
    %v222 = vpop.f32.mrb[0].mxu0
    %v223 = vadd.f32 0.0, %v222
    %v224 = vpop.f32.mrb[0].mxu0
    %225 = vmatprep.mubr.f32.mxu0 0.0
    %226 = vmatmul.mubr.f32.gmra.mrb[0].mxu0 %v89
    %v227 = vpop.f32.mrb[0].mxu0
    %v228 = vadd.f32 0.0, %v227
    %v229 = vpop.f32.mrb[0].mxu0
    %230 = vmatprep.mubr.f32.mxu0 0.0
    %231 = vmatmul.mubr.f32.gmra.mrb[0].mxu0 %v90
    %v232 = vpop.f32.mrb[0].mxu0
    %v233 = vadd.f32 0.0, %v232
    %v234 = vpop.f32.mrb[0].mxu0
    %235 = vmatprep.mubr.f32.mxu0 0.0
    %236 = vmatmul.mubr.f32.gmra.mrb[0].mxu0 %v91
    %v237 = vpop.f32.mrb[0].mxu0
    %v238 = vadd.f32 0.0, %v237
    %v239 = vpop.f32.mrb[0].mxu0
    %240 = vmatprep.mubr.f32.mxu0 0.0
    %241 = vmatmul.mubr.f32.gmra.mrb[0].mxu0 %v92
    %v242 = vpop.f32.mrb[0].mxu0
    %v243 = vadd.f32 0.0, %v242
    %v244 = vpop.f32.mrb[0].mxu0
    %245 = vmatprep.mubr.f32.mxu0 0.0
    %246 = vmatmul.mubr.f32.gmra.mrb[0].mxu0 %v93
    %v247 = vpop.f32.mrb[0].mxu0
    %v248 = vadd.f32 0.0, %v247
    %v249 = vpop.f32.mrb[0].mxu0
    %250 = vmatprep.mubr.f32.mxu0 0.0
    %251 = vmatmul.mubr.f32.gmra.mrb[0].mxu0 %v94
    %v252 = vpop.f32.mrb[0].mxu0
    %v253 = vadd.f32 0.0, %v252
    %v254 = vpop.f32.mrb[0].mxu0
    %255 = vdwg.mxu0
    %v256 = vadd.f32 %v63, %v178
    %v257 = vadd.f32 %v64, %v183
    %v258 = vadd.f32 %v65, %v188
    %v259 = vadd.f32 %v66, %v193
    %v260 = vadd.f32 %v67, %v198
    %v261 = vadd.f32 %v68, %v203
    %v262 = vadd.f32 %v69, %v208
    %v263 = vadd.f32 %v70, %v213
    %v264 = vadd.f32 %v71, %v218
    %v265 = vadd.f32 %v72, %v223
    %v266 = vadd.f32 %v73, %v228
    %v267 = vadd.f32 %v74, %v233
    %v268 = vadd.f32 %v75, %v238
    %v269 = vadd.f32 %v76, %v243
    %v270 = vadd.f32 %v77, %v248
    %v271 = vadd.f32 %v78, %v253
    %272 = vst [vmem:[#allocation2] sm:$0xff] %v256
    %273 = vst [vmem:[#allocation2 + $0x8] sm:$0xff] %v257
    %274 = vst [vmem:[#allocation2 + $0x10] sm:$0xff] %v258
    %275 = vst [vmem:[#allocation2 + $0x18] sm:$0xff] %v259
    %276 = vst [vmem:[#allocation2 + $0x20] sm:$0xff] %v260
    %277 = vst [vmem:[#allocation2 + $0x28] sm:$0xff] %v261
    %278 = vst [vmem:[#allocation2 + $0x30] sm:$0xff] %v262
    %279 = vst [vmem:[#allocation2 + $0x38] sm:$0xff] %v263
    %280 = vst [vmem:[#allocation2 + $0x40] sm:$0xff] %v264
    %281 = vst [vmem:[#allocation2 + $0x48] sm:$0xff] %v265
    %282 = vst [vmem:[#allocation2 + $0x50] sm:$0xff] %v266
    %283 = vst [vmem:[#allocation2 + $0x58] sm:$0xff] %v267
    %284 = vst [vmem:[#allocation2 + $0x60] sm:$0xff] %v268
    %285 = vst [vmem:[#allocation2 + $0x68] sm:$0xff] %v269
    %286 = vst [vmem:[#allocation2 + $0x70] sm:$0xff] %v270
    %287 = vst [vmem:[#allocation2 + $0x78] sm:$0xff] %v271
    // Predicated region
    $region26: #{tpu_custom_call.1} parent=1 // pred_check
      %p288 = pneg %p43
    $region27: #{tpu_custom_call.1} parent=1 // pred_check_branch
      %290 = sbr.rel (%p288) target = $region29
    $region28: #{tpu_custom_call.1} parent=1 // pred_region
      %v291 = vld [vmem:[#allocation2] sm:$0xff]
      %v292 = vld [vmem:[#allocation2 + $0x8] sm:$0xff]
      %v293 = vld [vmem:[#allocation2 + $0x10] sm:$0xff]
      %v294 = vld [vmem:[#allocation2 + $0x18] sm:$0xff]
      %v295 = vld [vmem:[#allocation2 + $0x20] sm:$0xff]
      %v296 = vld [vmem:[#allocation2 + $0x28] sm:$0xff]
      %v297 = vld [vmem:[#allocation2 + $0x30] sm:$0xff]
      %v298 = vld [vmem:[#allocation2 + $0x38] sm:$0xff]
      %v299 = vld [vmem:[#allocation2 + $0x40] sm:$0xff]
      %v300 = vld [vmem:[#allocation2 + $0x48] sm:$0xff]
      %v301 = vld [vmem:[#allocation2 + $0x50] sm:$0xff]
      %v302 = vld [vmem:[#allocation2 + $0x58] sm:$0xff]
      %v303 = vld [vmem:[#allocation2 + $0x60] sm:$0xff]
      %v304 = vld [vmem:[#allocation2 + $0x68] sm:$0xff]
      %v305 = vld [vmem:[#allocation2 + $0x70] sm:$0xff]
      %v306 = vld [vmem:[#allocation2 + $0x78] sm:$0xff]
      %v307 = vld [vmem:[%s2] sm:$0x1]
      %v309 = vlaneseq
      %v310 = vshrl.u32 %v309, 7
      %v311 = vsub.s32 0, %v310
      %v312 = vrot.slane %v307, %v311
      %v314 = vadd.f32 %v291, %v312
      %v315 = vadd.f32 %v292, %v312
      %v316 = vadd.f32 %v293, %v312
      %v317 = vadd.f32 %v294, %v312
      %v318 = vadd.f32 %v295, %v312
      %v319 = vadd.f32 %v296, %v312
      %v320 = vadd.f32 %v297, %v312
      %v321 = vadd.f32 %v298, %v312
      %v322 = vadd.f32 %v299, %v312
      %v323 = vadd.f32 %v300, %v312
      %v324 = vadd.f32 %v301, %v312
      %v325 = vadd.f32 %v302, %v312
      %v326 = vadd.f32 %v303, %v312
      %v327 = vadd.f32 %v304, %v312
      %v328 = vadd.f32 %v305, %v312
      %v329 = vadd.f32 %v306, %v312
      %330 = vst [vmem:[#allocation8] sm:$0xff] %v314
      %331 = vst [vmem:[#allocation8 + $0x8] sm:$0xff] %v315
      %332 = vst [vmem:[#allocation8 + $0x10] sm:$0xff] %v316
      %333 = vst [vmem:[#allocation8 + $0x18] sm:$0xff] %v317
      %334 = vst [vmem:[#allocation8 + $0x20] sm:$0xff] %v318
      %335 = vst [vmem:[#allocation8 + $0x28] sm:$0xff] %v319
      %336 = vst [vmem:[#allocation8 + $0x30] sm:$0xff] %v320
      %337 = vst [vmem:[#allocation8 + $0x38] sm:$0xff] %v321
      %338 = vst [vmem:[#allocation8 + $0x40] sm:$0xff] %v322
      %339 = vst [vmem:[#allocation8 + $0x48] sm:$0xff] %v323
      %340 = vst [vmem:[#allocation8 + $0x50] sm:$0xff] %v324
      %341 = vst [vmem:[#allocation8 + $0x58] sm:$0xff] %v325
      %342 = vst [vmem:[#allocation8 + $0x60] sm:$0xff] %v326
      %343 = vst [vmem:[#allocation8 + $0x68] sm:$0xff] %v327
      %344 = vst [vmem:[#allocation8 + $0x70] sm:$0xff] %v328
      %345 = vst [vmem:[#allocation8 + $0x78] sm:$0xff] %v329
    $region29: #{tpu_custom_call.1} parent=1 // pred_fallthru
      _
    // Predicated region
    $region30: #{tpu_custom_call.1} parent=1 // pred_check
      _
    $region31: #{tpu_custom_call.1} parent=1 // pred_check_branch
      %347 = sbr.rel (0) target = $region33
    $region32: #{tpu_custom_call.1} parent=1 // pred_region
      %s349 = ssub.s32 2048, 2048
      %350 = vsyncadd [#allocation5], %s349
      %s351 = sshll.u32 [#allocation8], 4
      %s352 = int_to_ptr.vmem [resolvable:$true] %s351
      %357 = dma.vmem_to_hbm [thread:$0]  %s352, 2048, %s3, [#allocation5], 128, 128, 8
    $region33: #{tpu_custom_call.1} parent=1 // pred_fallthru
      _
    // Predicated region
    $region34: #{tpu_custom_call.1} parent=1 // pred_check
      _
    $region35: #{tpu_custom_call.1} parent=1 // pred_check_branch
      %359 = sbr.rel (0) target = $region37
    $region36: #{tpu_custom_call.1} parent=1 // pred_region
      %360 = dma.done [#allocation5], 2048
    $region37: #{tpu_custom_call.1} parent=1 // pred_fallthru
      _
    %361 = vsyncpa [#allocation4], 1
    %362 = vsyncpa [#allocation7], 1
    %363 = vsyncpa [#allocation5], 1

</llo_original>
